<compile_context>
chip_gen: v7x
topology: tpu7x:2x2x1
jax: 0.10.0
libtpu: 0.0.40
codegen_flags: <defaults>
</compile_context>

<pallas_src>
import functools

import jax
import jax.numpy as jnp
import numpy as np
from jax.experimental import pallas as pl
from jax.experimental.pallas import tpu as pltpu


def _gnn_kernel(x_ref, adj_ref, ajr_ref, mrh_ref, mc_ref, w_ref, b_ref,
                out_ref, h_scr, *, scores_in_bf16):
    # One grid step == BB batch elements.
    BB, N, Cin = x_ref.shape
    D = out_ref.shape[-1]

    # Fused projection over all BB*N rows (one MXU pass):
    #   [:, :D]  = h = x @ W^T + b
    #   [:, D]   = 1.0                    (ones column -> row-sum comes out of the agg matmul)
    #   [:, D+1] = 0.5*(h @ wa_i + ba)    (attention "i" half-logit, bias folded in)
    if N % 8 == 0:
        x2 = x_ref[...].reshape(BB * N, Cin)      # free sublane merge (guarded by N % 8 == 0)
        h = jnp.dot(x2, w_ref[...], preferred_element_type=jnp.float32) + b_ref[...]
        h_scr[...] = h.reshape(BB, N, D + 2)
    else:
        # Keep the projection batched so no reshape crosses an (8,128) tile boundary.
        h = jnp.einsum("bnc,cd->bnd", x_ref[...], w_ref[...],
                       preferred_element_type=jnp.float32) + b_ref[...]
        h_scr[...] = h

    def body(b, carry):
        hb = h_scr[b]                        # (N, D+2) f32
        h1 = hb[:, :D + 1]                   # (N, D+1) == [h | 1]
        ai = hb[:, D + 1:D + 2]              # (N, 1)   == 0.5*(h·wa_i + ba)
        ajr = ajr_ref[b]                     # (1, N)   == 0.5*(h·wa_j)   (wrapper-computed row)
        mrh = mrh_ref[b]                     # (1, N)   == 0.5*mask_j
        mc = mc_ref[b]                       # (N, 1)   == mask_i

        # att[i,j] = sigmoid(h_i·wa_i + h_j·wa_j + ba) * adj[i,j] * mask_j
        #          = (tanh(ai + ajr) + 1) * adj * (0.5*mask_j)
        # (single EUP tanh, no transposes; mask_i is redundant here -- applied at the end)
        if scores_in_bf16:                   # opt-in for v6e/v7x (bf16 EUP/VPU)
            t = ai.astype(jnp.bfloat16) + ajr.astype(jnp.bfloat16)
            att16 = ((jnp.tanh(t) + 1.0)
                     * adj_ref[b].astype(jnp.bfloat16)
                     * mrh.astype(jnp.bfloat16))
        else:
            t = ai + ajr
            att16 = ((jnp.tanh(t) + 1.0) * adj_ref[b].astype(jnp.float32)
                     * mrh).astype(jnp.bfloat16)

        # Fused aggregation + row-sum: one bf16 MXU pass gives [att @ h | att @ 1].
        agg_aug = jnp.dot(att16, h1.astype(jnp.bfloat16),
                          preferred_element_type=jnp.float32)        # (N, D+1) f32
        denom = agg_aug[:, D:D + 1] + 1e-8                            # (N, 1)
        scale = pl.reciprocal(denom, approx=True) * mc                # fold mask_i into (N,1)
        out_ref[b] = (agg_aug[:, :D] * scale).astype(out_ref.dtype)
        return carry

    jax.lax.fori_loop(0, BB, body, 0, unroll=BB <= 4)


def _vmem_limit_bytes():
    """Generation-aware VMEM limit: ~60% of physical (38 MiB on v7x, ~77 MiB on v5e/v6e)."""
    try:
        cap = int(pltpu.get_tpu_info().vmem_capacity_bytes)
    except Exception:
        cap = 64 * 1024 * 1024          # conservative fallback (v7x-sized VMEM)
    return max(24 * 1024 * 1024, min(cap * 3 // 5, 100 * 1024 * 1024))


def _pick_block_b(B, N, Cin, D, vmem_budget, max_block_b=64):
    """Largest divisor of B whose block fits the VMEM budget; prefers >=4 grid steps so a
    dual-TensorCore chip (v7x) gets >=2 steps per core, else >=2 steps, else the largest."""
    # Per-batch-element bytes: double-buffered I/O blocks + one row of the h scratch.
    io = 4 * N * Cin + 2 * N * N + 4 * (2 * N + N) + 4 * N * D   # x + adj(bf16) + rows/col masks + out
    per_b = 2 * io + 4 * N * (D + 2)
    # Batch-independent bytes: weights (double-buffered) + per-iteration (N,N) f32 temps.
    fixed = 2 * 4 * (Cin + 1) * (D + 2) + 4 * 4 * N * N + 4 * N * (D + 2)
    cap = max(1, min((vmem_budget - fixed) // max(per_b, 1), max_block_b))
    divisors = [d for d in range(1, B + 1) if B % d == 0 and d <= cap] or [1]
    for min_steps in (4, 2):            # 2 steps per TC on v7x, else plain megacore slack
        cands = [d for d in divisors if B // d >= min_steps]
        if cands:
            return max(cands)
    return max(divisors)


@functools.partial(jax.jit, static_argnames=("block_b", "scores_in_bf16"))
def gnn_layer(x, adj, w_t, b, wa_i, wa_j, ba, mask=None, block_b=None,
              scores_in_bf16=False):
    """x: (B,N,Cin)  adj: (B,N,N) 0/1 (bf16/int8/f32; low precision is exact only for 0/1)
    mask: (B,N) or None  ->  (B,N,D).  scores_in_bf16=True is an opt-in v6e/v7x fast path."""
    B, N, Cin = x.shape
    D = w_t.shape[1]

    # Augmented projection: columns [ W^T | 0 | 0.5*W^T@wa_i ], bias [ b | 1 | 0.5*(b@wa_i+ba) ].
    w_aug = jnp.concatenate(
        [w_t, jnp.zeros((Cin, 1), w_t.dtype), 0.5 * (w_t @ wa_i)], axis=1)
    b_aug = jnp.concatenate(
        [b, jnp.ones((1, 1), b.dtype), 0.5 * (b @ wa_i + ba)], axis=1)

    # Attention "j" half-logit in ROW layout (B,1,N): aj[b,0,n] = 0.5*(h[b,n]·wa_j).
    # Tiny extra input (O(B*N)) that removes all in-kernel transposes.
    aj_row = (0.5 * (x.reshape(B * N, Cin) @ (w_t @ wa_j) + b @ wa_j)).reshape(B, 1, N)

    if mask is None:
        mcol = jnp.ones((B, N, 1), jnp.float32)
        mrow_half = jnp.full((B, 1, N), 0.5, jnp.float32)
    else:
        m = mask.astype(jnp.float32)
        mcol = m.reshape(B, N, 1)
        mrow_half = 0.5 * m.reshape(B, 1, N)      # 0.5 of the tanh->sigmoid form folded in

    vmem_limit = _vmem_limit_bytes()
    bb = _pick_block_b(B, N, Cin, D, vmem_budget=vmem_limit // 2) if block_b is None else block_b
    if B % bb != 0:
        raise ValueError(f"block_b={bb} must divide batch size B={B}")
    grid = (B // bb,)

    kernel = functools.partial(_gnn_kernel, scores_in_bf16=scores_in_bf16)
    out = pl.pallas_call(
        kernel,
        out_shape=jax.ShapeDtypeStruct((B, N, D), jnp.float32),
        grid_spec=pltpu.PrefetchScalarGridSpec(
            num_scalar_prefetch=0,
            grid=grid,
            in_specs=[
                pl.BlockSpec((bb, N, Cin), lambda i: (i, 0, 0)),   # x
                # adj: add pipeline_mode=pl.Buffered(3) here on v5e/v6e if DMA is exposed.
                pl.BlockSpec((bb, N, N), lambda i: (i, 0, 0)),     # adj (bf16/int8 in HBM)
                pl.BlockSpec((bb, 1, N), lambda i: (i, 0, 0)),     # 0.5*(h·wa_j) row
                pl.BlockSpec((bb, 1, N), lambda i: (i, 0, 0)),     # 0.5*mask_j row
                pl.BlockSpec((bb, N, 1), lambda i: (i, 0, 0)),     # mask_i col
                pl.BlockSpec((Cin, D + 2), lambda i: (0, 0)),      # augmented W^T
                pl.BlockSpec((1, D + 2), lambda i: (0, 0)),        # augmented bias
            ],
            out_specs=pl.BlockSpec((bb, N, D), lambda i: (i, 0, 0)),
            scratch_shapes=[pltpu.VMEM((bb, N, D + 2), jnp.float32)],
        ),
        compiler_params=pltpu.CompilerParams(
            dimension_semantics=("parallel",),
            vmem_limit_bytes=int(vmem_limit),
        ),
    )(x, adj, aj_row, mrow_half, mcol, w_aug, b_aug)
    return out


def _reference(x, adj, w_t, b, wa_i, wa_j, ba, mask=None):
    """Pure-JAX reference mirroring the PyTorch forward exactly (f32 throughout)."""
    h = x @ w_t + b[0]                                        # (B, N, D)
    B, N, D = h.shape
    h_i = jnp.broadcast_to(h[:, :, None, :], (B, N, N, D))
    h_j = jnp.broadcast_to(h[:, None, :, :], (B, N, N, D))
    att_in = jnp.concatenate([h_i, h_j], axis=-1)             # (B, N, N, 2D)
    wa = jnp.concatenate([wa_i, wa_j], axis=0)                # (2D, 1)
    score = jax.nn.sigmoid((att_in @ wa)[..., 0] + ba[0, 0])  # (B, N, N)
    score = score * adj
    if mask is not None:
        score = score * mask[:, :, None] * mask[:, None, :]
    s = jnp.sum(score, axis=-1, keepdims=True) + 1e-8
    w = score / s
    h_new = jnp.einsum("bij,bjd->bid", w, h)
    if mask is not None:
        h_new = h_new * mask[:, :, None]
    return h_new


if __name__ == "__main__":
    B, N, IN_DIM, OUT_DIM = 2, 8, 16, 32

    key = jax.random.PRNGKey(0)
    kx, kadj, kw, kb, kwa, kba, kmask = jax.random.split(key, 7)

    # Inputs.  adj is 0/1, so bf16 storage is exact and halves the N^2 HBM stream
    # (pass int8 instead on HBM-bound v5e to quarter it).
    x = jax.random.normal(kx, (B, N, IN_DIM), dtype=jnp.float32)
    adj = (jax.random.uniform(kadj, (B, N, N)) > 0.5).astype(jnp.bfloat16)
    mask = (jax.random.uniform(kmask, (B, N)) > 0.2).astype(jnp.float32)

    # Parameters (deterministic init, PyTorch-style uniform bounds).
    bound_lin = 1.0 / np.sqrt(IN_DIM)
    w_lin = jax.random.uniform(kw, (OUT_DIM, IN_DIM), minval=-bound_lin, maxval=bound_lin)
    b_lin = jax.random.uniform(kb, (OUT_DIM,), minval=-bound_lin, maxval=bound_lin)

    bound_att = 1.0 / np.sqrt(2 * OUT_DIM)
    w_att = jax.random.uniform(kwa, (1, 2 * OUT_DIM), minval=-bound_att, maxval=bound_att)
    b_att = jax.random.uniform(kba, (1,), minval=-bound_att, maxval=bound_att)

    # Reshape params for the kernel.
    w_t = jnp.transpose(w_lin)                        # (Cin, D)
    b = b_lin.reshape(1, OUT_DIM)                     # (1, D)
    wa_i = jnp.transpose(w_att[:, :OUT_DIM])          # (D, 1)
    wa_j = jnp.transpose(w_att[:, OUT_DIM:])          # (D, 1)
    ba = b_att.reshape(1, 1)                          # (1, 1)

    # Tolerance 1e-2: bf16 MXU aggregation (<~4e-3) + approx reciprocal (~1e-3).
    ref = _reference(x, adj.astype(jnp.float32), w_t, b, wa_i, wa_j, ba, mask=mask)

    out = jax.block_until_ready(gnn_layer(x, adj, w_t, b, wa_i, wa_j, ba, mask=mask))
    np.testing.assert_allclose(np.asarray(out), np.asarray(ref), rtol=1e-2, atol=1e-2)

    # mask=None path.
    out_nm = jax.block_until_ready(gnn_layer(x, adj, w_t, b, wa_i, wa_j, ba))
    ref_nm = _reference(x, adj.astype(jnp.float32), w_t, b, wa_i, wa_j, ba)
    np.testing.assert_allclose(np.asarray(out_nm), np.asarray(ref_nm), rtol=1e-2, atol=1e-2)

    # Multi-batch-per-step path (BB=2, single grid step) to exercise the in-kernel b loop.
    out_bb = jax.block_until_ready(gnn_layer(x, adj, w_t, b, wa_i, wa_j, ba, mask=mask, block_b=2))
    np.testing.assert_allclose(np.asarray(out_bb), np.asarray(ref), rtol=1e-2, atol=1e-2)

    print("KERNEL_OK")
</pallas_src>

<mosaic_0001>
module attributes {stable_mosaic.version = 11 : i64} {
  func.func @_gnn_kernel(%arg0: i32, %arg1: memref<1x8x16xf32, #tpu.memory_space<vmem>>, %arg2: memref<1x8x8xbf16, #tpu.memory_space<vmem>>, %arg3: memref<1x1x8xf32, #tpu.memory_space<vmem>>, %arg4: memref<1x1x8xf32, #tpu.memory_space<vmem>>, %arg5: memref<1x8x1xf32, #tpu.memory_space<vmem>>, %arg6: memref<16x34xf32, #tpu.memory_space<vmem>>, %arg7: memref<1x34xf32, #tpu.memory_space<vmem>>, %arg8: memref<1x8x32xf32, #tpu.memory_space<vmem>>, %arg9: memref<1x8x34xf32, #tpu.memory_space<vmem>>) attributes {dimension_semantics = [#tpu.dimension_semantics<parallel>], iteration_bounds = array<i64: 2>, scalar_prefetch = 0 : i64, scratch_operands = 1 : i64, tpu.core_type = #tpu.core_type<tc>, window_params = [{transform_indices = @transform_0, window_bounds = array<i64: 1, 8, 16>}, {transform_indices = @transform_1, window_bounds = array<i64: 1, 8, 8>}, {transform_indices = @transform_2, window_bounds = array<i64: 1, 1, 8>}, {transform_indices = @transform_3, window_bounds = array<i64: 1, 1, 8>}, {transform_indices = @transform_4, window_bounds = array<i64: 1, 8, 1>}, {pipeline_mode = #tpu.pipeline_mode<synchronous>, transform_indices = @transform_5, window_bounds = array<i64: 16, 34>}, {pipeline_mode = #tpu.pipeline_mode<synchronous>, transform_indices = @transform_6, window_bounds = array<i64: 1, 34>}, {transform_indices = @transform_7, window_bounds = array<i64: 1, 8, 32>}]} {
    %c0 = arith.constant 0 : index
    %c0_0 = arith.constant 0 : index
    %c0_1 = arith.constant 0 : index
    %0 = vector.load %arg1[%c0, %c0_0, %c0_1] : memref<1x8x16xf32, #tpu.memory_space<vmem>>, vector<1x8x16xf32>
    %1 = vector.shape_cast %0 : vector<1x8x16xf32> to vector<8x16xf32>
    %c0_2 = arith.constant 0 : index
    %c0_3 = arith.constant 0 : index
    %2 = vector.load %arg6[%c0_2, %c0_3] : memref<16x34xf32, #tpu.memory_space<vmem>>, vector<16x34xf32>
    %cst = arith.constant dense<0.000000e+00> : vector<8x34xf32>
    %3 = tpu.matmul %1, %2, %cst {dimension_numbers = #tpu.dot_dimension_numbers<[1], [0], [0], [1], [0, 0, 1, 1], [], []>} : vector<8x16xf32>, vector<16x34xf32>, vector<8x34xf32> -> vector<8x34xf32>
    %c0_4 = arith.constant 0 : index
    %c0_5 = arith.constant 0 : index
    %4 = vector.load %arg7[%c0_4, %c0_5] : memref<1x34xf32, #tpu.memory_space<vmem>>, vector<1x34xf32>
    %5 = vector.broadcast %4 : vector<1x34xf32> to vector<8x34xf32>
    %6 = arith.addf %3, %5 : vector<8x34xf32>
    %7 = vector.shape_cast %6 : vector<8x34xf32> to vector<1x8x34xf32>
    %c0_6 = arith.constant 0 : index
    %c0_7 = arith.constant 0 : index
    %c0_8 = arith.constant 0 : index
    %8 = vector.load %arg9[%c0_6, %c0_7, %c0_8] : memref<1x8x34xf32, #tpu.memory_space<vmem>>, vector<1x8x34xf32>
    tpu.vector_store %arg9[%c0_6, %c0_7, %c0_8], %7 {strides = array<i32>} : memref<1x8x34xf32, #tpu.memory_space<vmem>>, vector<1x8x34xf32>,
    %c0_i32 = arith.constant 0 : i32
    %9 = arith.index_cast %c0_i32 : i32 to index
    %c0_9 = arith.constant 0 : index
    %c0_10 = arith.constant 0 : index
    %10 = vector.load %arg9[%9, %c0_9, %c0_10] : memref<1x8x34xf32, #tpu.memory_space<vmem>>, vector<1x8x34xf32>
    %11 = vector.shape_cast %10 : vector<1x8x34xf32> to vector<8x34xf32>
    %12 = vector.extract_strided_slice %11 {offsets = [0, 0], sizes = [8, 33], strides = [1, 1]} : vector<8x34xf32> to vector<8x33xf32>
    %13 = vector.extract_strided_slice %11 {offsets = [0, 33], sizes = [8, 1], strides = [1, 1]} : vector<8x34xf32> to vector<8x1xf32>
    %14 = arith.index_cast %c0_i32 : i32 to index
    %c0_11 = arith.constant 0 : index
    %c0_12 = arith.constant 0 : index
    %15 = vector.load %arg3[%14, %c0_11, %c0_12] : memref<1x1x8xf32, #tpu.memory_space<vmem>>, vector<1x1x8xf32>
    %16 = vector.shape_cast %15 : vector<1x1x8xf32> to vector<1x8xf32>
    %17 = arith.index_cast %c0_i32 : i32 to index
    %c0_13 = arith.constant 0 : index
    %c0_14 = arith.constant 0 : index
    %18 = vector.load %arg4[%17, %c0_13, %c0_14] : memref<1x1x8xf32, #tpu.memory_space<vmem>>, vector<1x1x8xf32>
    %19 = vector.shape_cast %18 : vector<1x1x8xf32> to vector<1x8xf32>
    %20 = arith.index_cast %c0_i32 : i32 to index
    %c0_15 = arith.constant 0 : index
    %c0_16 = arith.constant 0 : index
    %21 = vector.load %arg5[%20, %c0_15, %c0_16] : memref<1x8x1xf32, #tpu.memory_space<vmem>>, vector<1x8x1xf32>
    %22 = vector.shape_cast %21 : vector<1x8x1xf32> to vector<8x1xf32>
    %23 = vector.broadcast %13 : vector<8x1xf32> to vector<8x8xf32>
    %24 = vector.broadcast %16 : vector<1x8xf32> to vector<8x8xf32>
    %25 = arith.addf %23, %24 : vector<8x8xf32>
    %26 = math.tanh %25 : vector<8x8xf32>
    %cst_17 = arith.constant 1.000000e+00 : f32
    %27 = vector.broadcast %cst_17 : f32 to vector<8x8xf32>
    %28 = arith.addf %26, %27 : vector<8x8xf32>
    %29 = arith.index_cast %c0_i32 : i32 to index
    %c0_18 = arith.constant 0 : index
    %c0_19 = arith.constant 0 : index
    %30 = vector.load %arg2[%29, %c0_18, %c0_19] : memref<1x8x8xbf16, #tpu.memory_space<vmem>>, vector<1x8x8xbf16>
    %31 = vector.shape_cast %30 : vector<1x8x8xbf16> to vector<8x8xbf16>
    %32 = arith.extf %31 : vector<8x8xbf16> to vector<8x8xf32>
    %33 = arith.mulf %28, %32 : vector<8x8xf32>
    %34 = vector.broadcast %19 : vector<1x8xf32> to vector<8x8xf32>
    %35 = arith.mulf %33, %34 : vector<8x8xf32>
    %36 = arith.truncf %35 : vector<8x8xf32> to vector<8x8xbf16>
    %37 = arith.truncf %12 : vector<8x33xf32> to vector<8x33xbf16>
    %cst_20 = arith.constant dense<0.000000e+00> : vector<8x33xf32>
    %38 = tpu.matmul %36, %37, %cst_20 {dimension_numbers = #tpu.dot_dimension_numbers<[1], [0], [0], [1], [0, 0, 1, 1], [], []>} : vector<8x8xbf16>, vector<8x33xbf16>, vector<8x33xf32> -> vector<8x33xf32>
    %39 = vector.extract_strided_slice %38 {offsets = [0, 32], sizes = [8, 1], strides = [1, 1]} : vector<8x33xf32> to vector<8x1xf32>
    %cst_21 = arith.constant 9.99999993E-9 : f32
    %40 = vector.broadcast %cst_21 : f32 to vector<8x1xf32>
    %41 = arith.addf %39, %40 : vector<8x1xf32>
    %42 = tpu.reciprocal %41 {approx = true} : vector<8x1xf32> -> vector<8x1xf32>
    %43 = arith.mulf %42, %22 : vector<8x1xf32>
    %44 = vector.extract_strided_slice %38 {offsets = [0, 0], sizes = [8, 32], strides = [1, 1]} : vector<8x33xf32> to vector<8x32xf32>
    %45 = vector.broadcast %43 : vector<8x1xf32> to vector<8x32xf32>
    %46 = arith.mulf %44, %45 : vector<8x32xf32>
    %47 = arith.index_cast %c0_i32 : i32 to index
    %c0_22 = arith.constant 0 : index
    %c0_23 = arith.constant 0 : index
    %48 = vector.load %arg8[%47, %c0_22, %c0_23] : memref<1x8x32xf32, #tpu.memory_space<vmem>>, vector<1x8x32xf32>
    %49 = vector.shape_cast %48 : vector<1x8x32xf32> to vector<8x32xf32>
    %50 = vector.shape_cast %46 : vector<8x32xf32> to vector<1x8x32xf32>
    tpu.vector_store %arg8[%47, %c0_22, %c0_23], %50 {strides = array<i32>} : memref<1x8x32xf32, #tpu.memory_space<vmem>>, vector<1x8x32xf32>,
    %c1_i32 = arith.constant 1 : i32
    return
  }
  func.func @transform_0(%arg0: i32) -> (i32, i32, i32) {
    %c0_i32 = arith.constant 0 : i32
    %c0_i32_0 = arith.constant 0 : i32
    %c0_i32_1 = arith.constant 0 : i32
    return %arg0, %c0_i32, %c0_i32_0 : i32, i32, i32
  }
  func.func @transform_1(%arg0: i32) -> (i32, i32, i32) {
    %c0_i32 = arith.constant 0 : i32
    %c0_i32_0 = arith.constant 0 : i32
    %c0_i32_1 = arith.constant 0 : i32
    return %arg0, %c0_i32, %c0_i32_0 : i32, i32, i32
  }
  func.func @transform_2(%arg0: i32) -> (i32, i32, i32) {
    %c0_i32 = arith.constant 0 : i32
    %c0_i32_0 = arith.constant 0 : i32
    %c0_i32_1 = arith.constant 0 : i32
    return %arg0, %c0_i32, %c0_i32_0 : i32, i32, i32
  }
  func.func @transform_3(%arg0: i32) -> (i32, i32, i32) {
    %c0_i32 = arith.constant 0 : i32
    %c0_i32_0 = arith.constant 0 : i32
    %c0_i32_1 = arith.constant 0 : i32
    return %arg0, %c0_i32, %c0_i32_0 : i32, i32, i32
  }
  func.func @transform_4(%arg0: i32) -> (i32, i32, i32) {
    %c0_i32 = arith.constant 0 : i32
    %c0_i32_0 = arith.constant 0 : i32
    %c0_i32_1 = arith.constant 0 : i32
    return %arg0, %c0_i32, %c0_i32_0 : i32, i32, i32
  }
  func.func @transform_5(%arg0: i32) -> (i32, i32) {
    %c0_i32 = arith.constant 0 : i32
    %c0_i32_0 = arith.constant 0 : i32
    %c0_i32_1 = arith.constant 0 : i32
    return %c0_i32, %c0_i32_0 : i32, i32
  }
  func.func @transform_6(%arg0: i32) -> (i32, i32) {
    %c0_i32 = arith.constant 0 : i32
    %c0_i32_0 = arith.constant 0 : i32
    %c0_i32_1 = arith.constant 0 : i32
    return %c0_i32, %c0_i32_0 : i32, i32
  }
  func.func @transform_7(%arg0: i32) -> (i32, i32, i32) {
    %c0_i32 = arith.constant 0 : i32
    %c0_i32_0 = arith.constant 0 : i32
    %c0_i32_1 = arith.constant 0 : i32
    return %arg0, %c0_i32, %c0_i32_0 : i32, i32, i32
  }
}

</mosaic_0001>

<llo_original>
// kernel: gnn_layer.1
$region0: #{gnn_layer.1}
  #allocation0 [shape = 'u32[]', space=smem, size = 0x4, offset = 0x4, fixed_abs, tag = 'smem constant byte address 0x4 - core index']
  #allocation1 [shape = 'u32[144,128]{1,0:T(1,128)}', space=vmem, size = 0x12000, scoped, tag = 'internal scratch']
  #allocation2 [shape = 'f32[1,8,34]{2,1,0:T(8,128)}', space=vmem, size = 0x1000, scoped, tag = 'scratch operand']
  %s0 = inlined_call_operand.vmem [shape: f32[2,8,16], index: 0, kind: input, shape index: {}]
  %s1 = inlined_call_operand.vmem [shape: bf16[2,8,8], index: 1, kind: input, shape index: {}]
  %s2 = inlined_call_operand.vmem [shape: f32[2,1,8], index: 2, kind: input, shape index: {}]
  %s3 = inlined_call_operand.vmem [shape: f32[2,1,8], index: 3, kind: input, shape index: {}]
  %s4 = inlined_call_operand.vmem [shape: f32[2,8,1], index: 4, kind: input, shape index: {}]
  %s5 = inlined_call_operand.vmem [shape: f32[16,34], index: 5, kind: input, shape index: {}]
  %s6 = inlined_call_operand.vmem [shape: f32[1,34], index: 6, kind: input, shape index: {}]
  %s7 = inlined_call_operand.hbm [shape: f32[2,8,32], index: 7, kind: output, shape index: {}]
  %s8 = sld [smem:[#allocation0]]
  $region61: #{gnn_layer.1} parent=0
    _
  %s10 = ssub.s32 1, %s8
  %s11 = scalar_select 0, %s10, %s8
  $region1: #{gnn_layer.1} parent=0
    #allocation3 [shape = 'u8[8192]{0}', space=vmem, size = 0x2000, scoped, tag = 'output window, operand 0']
    #allocation4 [shape = 's32[2]{0}', space=sflag, size = 0x8, scoped, tag = 'scoped memory for gnn_layer.1']
    %12 = vsyncpa [#allocation4], 0
    %s13 = scalar_lea.sflag [#allocation4], 1
    %14 = vsyncpa %s13, 0
    loop: start=0, step=1, limit=4
    $region2: #{gnn_layer.1} parent=1 // loop_pre_header
      _
    $region3: #{gnn_layer.1} parent=1 // loop_header
      %s16 = sphi 0, %s20
      %p17 = scmp.ge.s32.totalorder %s16, 4
      %s26 = sphi 0, %s28
      %s29 = sphi 0, %s26
      %s30 = sphi 0, %s29
      %s46 = sphi 0, %s30
      %s52 = sphi 0, %s54
      %s55 = sphi 0, %s52
      %s56 = sphi 0, %s55
      %s72 = sphi 0, %s56
      %s78 = sphi 0, %s80
      %s81 = sphi 0, %s78
      %s82 = sphi 0, %s81
      %s98 = sphi 0, %s82
      %s104 = sphi 0, %s106
      %s107 = sphi 0, %s104
      %s108 = sphi 0, %s107
      %s124 = sphi 0, %s108
      %s130 = sphi 0, %s132
      %s133 = sphi 0, %s130
      %s134 = sphi 0, %s133
      %s150 = sphi 0, %s134
      %s154 = sphi 0, %s154
      %s156 = sphi 0, %s154
      %s157 = sphi 0, %s156
      %s171 = sphi 0, %s157
      %s175 = sphi 0, %s175
      %s177 = sphi 0, %s175
      %s178 = sphi 0, %s177
      %s192 = sphi 0, %s178
      %s198 = sphi 0, %s200
      %s201 = sphi 0, %s198
      %s202 = sphi 0, %s201
      %s218 = sphi 0, %s202
    $region4: #{gnn_layer.1} parent=1 // loop_header_branch
      %19 = sbr.rel (%p17) target = $region8
    $region5: #{gnn_layer.1} parent=1 // loop_body
      %s21 = ssub.s32 %s16, 1
      %s22 = ssub.s32 %s16, 2
      %s23 = sadd.s32 %s16, 1
      %s24 = ssub.s32 %s16, %s23
      %p25 = scmp.eq.s32.totalorder %s24, 0
      %s27 = sadd.s32 %s26, 1
      %s28 = scalar_select %p25, %s26, %s27
      %p31 = pneg %p25
      %p32 = scmp.eq.s32.totalorder %s16, 1
      %p33 = por %p31, %p32
      %p34 = scmp.ne.s32.totalorder %s26, %s29
      %p35 = scmp.eq.s32.totalorder %s16, 0
      %p36 = por %p34, %p35
      %p37 = scmp.ne.s32.totalorder %s26, %s29
      %p38 = scmp.eq.s32.totalorder %s21, 1
      %p39 = por %p37, %p38
      %p40 = scmp.ne.s32.totalorder %s29, %s30
      %p41 = scmp.eq.s32.totalorder %s21, 0
      %p42 = por %p40, %p41
      %p43 = scmp.ne.s32.totalorder %s29, %s30
      %p44 = scmp.eq.s32.totalorder %s22, 1
      %p45 = por %p43, %p44
      %p47 = scmp.ne.s32.totalorder %s30, %s46
      %p48 = scmp.eq.s32.totalorder %s22, 0
      %p49 = por %p47, %p48
      %s50 = ssub.s32 %s16, %s23
      %p51 = scmp.eq.s32.totalorder %s50, 0
      %s53 = sadd.s32 %s52, 1
      %s54 = scalar_select %p51, %s52, %s53
      %p57 = pneg %p51
      %p58 = scmp.eq.s32.totalorder %s16, 1
      %p59 = por %p57, %p58
      %p60 = scmp.ne.s32.totalorder %s52, %s55
      %p61 = scmp.eq.s32.totalorder %s16, 0
      %p62 = por %p60, %p61
      %p63 = scmp.ne.s32.totalorder %s52, %s55
      %p64 = scmp.eq.s32.totalorder %s21, 1
      %p65 = por %p63, %p64
      %p66 = scmp.ne.s32.totalorder %s55, %s56
      %p67 = scmp.eq.s32.totalorder %s21, 0
      %p68 = por %p66, %p67
      %p69 = scmp.ne.s32.totalorder %s55, %s56
      %p70 = scmp.eq.s32.totalorder %s22, 1
      %p71 = por %p69, %p70
      %p73 = scmp.ne.s32.totalorder %s56, %s72
      %p74 = scmp.eq.s32.totalorder %s22, 0
      %p75 = por %p73, %p74
      %s76 = ssub.s32 %s16, %s23
      %p77 = scmp.eq.s32.totalorder %s76, 0
      %s79 = sadd.s32 %s78, 1
      %s80 = scalar_select %p77, %s78, %s79
      %p83 = pneg %p77
      %p84 = scmp.eq.s32.totalorder %s16, 1
      %p85 = por %p83, %p84
      %p86 = scmp.ne.s32.totalorder %s78, %s81
      %p87 = scmp.eq.s32.totalorder %s16, 0
      %p88 = por %p86, %p87
      %p89 = scmp.ne.s32.totalorder %s78, %s81
      %p90 = scmp.eq.s32.totalorder %s21, 1
      %p91 = por %p89, %p90
      %p92 = scmp.ne.s32.totalorder %s81, %s82
      %p93 = scmp.eq.s32.totalorder %s21, 0
      %p94 = por %p92, %p93
      %p95 = scmp.ne.s32.totalorder %s81, %s82
      %p96 = scmp.eq.s32.totalorder %s22, 1
      %p97 = por %p95, %p96
      %p99 = scmp.ne.s32.totalorder %s82, %s98
      %p100 = scmp.eq.s32.totalorder %s22, 0
      %p101 = por %p99, %p100
      %s102 = ssub.s32 %s16, %s23
      %p103 = scmp.eq.s32.totalorder %s102, 0
      %s105 = sadd.s32 %s104, 1
      %s106 = scalar_select %p103, %s104, %s105
      %p109 = pneg %p103
      %p110 = scmp.eq.s32.totalorder %s16, 1
      %p111 = por %p109, %p110
      %p112 = scmp.ne.s32.totalorder %s104, %s107
      %p113 = scmp.eq.s32.totalorder %s16, 0
      %p114 = por %p112, %p113
      %p115 = scmp.ne.s32.totalorder %s104, %s107
      %p116 = scmp.eq.s32.totalorder %s21, 1
      %p117 = por %p115, %p116
      %p118 = scmp.ne.s32.totalorder %s107, %s108
      %p119 = scmp.eq.s32.totalorder %s21, 0
      %p120 = por %p118, %p119
      %p121 = scmp.ne.s32.totalorder %s107, %s108
      %p122 = scmp.eq.s32.totalorder %s22, 1
      %p123 = por %p121, %p122
      %p125 = scmp.ne.s32.totalorder %s108, %s124
      %p126 = scmp.eq.s32.totalorder %s22, 0
      %p127 = por %p125, %p126
      %s128 = ssub.s32 %s16, %s23
      %p129 = scmp.eq.s32.totalorder %s128, 0
      %s131 = sadd.s32 %s130, 1
      %s132 = scalar_select %p129, %s130, %s131
      %p135 = pneg %p129
      %p136 = scmp.eq.s32.totalorder %s16, 1
      %p137 = por %p135, %p136
      %p138 = scmp.ne.s32.totalorder %s130, %s133
      %p139 = scmp.eq.s32.totalorder %s16, 0
      %p140 = por %p138, %p139
      %p141 = scmp.ne.s32.totalorder %s130, %s133
      %p142 = scmp.eq.s32.totalorder %s21, 1
      %p143 = por %p141, %p142
      %p144 = scmp.ne.s32.totalorder %s133, %s134
      %p145 = scmp.eq.s32.totalorder %s21, 0
      %p146 = por %p144, %p145
      %p147 = scmp.ne.s32.totalorder %s133, %s134
      %p148 = scmp.eq.s32.totalorder %s22, 1
      %p149 = por %p147, %p148
      %p151 = scmp.ne.s32.totalorder %s134, %s150
      %p152 = scmp.eq.s32.totalorder %s22, 0
      %p153 = por %p151, %p152
      %s155 = sadd.s32 %s154, 1
      %p158 = scmp.eq.s32.totalorder %s16, 1
      %p159 = scmp.ne.s32.totalorder %s154, %s156
      %p160 = scmp.eq.s32.totalorder %s16, 0
      %p161 = por %p159, %p160
      %p162 = scmp.ne.s32.totalorder %s154, %s156
      %p163 = scmp.eq.s32.totalorder %s21, 1
      %p164 = por %p162, %p163
      %p165 = scmp.ne.s32.totalorder %s156, %s157
      %p166 = scmp.eq.s32.totalorder %s21, 0
      %p167 = por %p165, %p166
      %p168 = scmp.ne.s32.totalorder %s156, %s157
      %p169 = scmp.eq.s32.totalorder %s22, 1
      %p170 = por %p168, %p169
      %p172 = scmp.ne.s32.totalorder %s157, %s171
      %p173 = scmp.eq.s32.totalorder %s22, 0
      %p174 = por %p172, %p173
      %s176 = sadd.s32 %s175, 1
      %p179 = scmp.eq.s32.totalorder %s16, 1
      %p180 = scmp.ne.s32.totalorder %s175, %s177
      %p181 = scmp.eq.s32.totalorder %s16, 0
      %p182 = por %p180, %p181
      %p183 = scmp.ne.s32.totalorder %s175, %s177
      %p184 = scmp.eq.s32.totalorder %s21, 1
      %p185 = por %p183, %p184
      %p186 = scmp.ne.s32.totalorder %s177, %s178
      %p187 = scmp.eq.s32.totalorder %s21, 0
      %p188 = por %p186, %p187
      %p189 = scmp.ne.s32.totalorder %s177, %s178
      %p190 = scmp.eq.s32.totalorder %s22, 1
      %p191 = por %p189, %p190
      %p193 = scmp.ne.s32.totalorder %s178, %s192
      %p194 = scmp.eq.s32.totalorder %s22, 0
      %p195 = por %p193, %p194
      %s196 = ssub.s32 %s16, %s23
      %p197 = scmp.eq.s32.totalorder %s196, 0
      %s199 = sadd.s32 %s198, 1
      %s200 = scalar_select %p197, %s198, %s199
      %p203 = pneg %p197
      %p204 = scmp.eq.s32.totalorder %s16, 1
      %p205 = por %p203, %p204
      %p206 = scmp.ne.s32.totalorder %s198, %s201
      %p207 = scmp.eq.s32.totalorder %s16, 0
      %p208 = por %p206, %p207
      %p209 = scmp.ne.s32.totalorder %s198, %s201
      %p210 = scmp.eq.s32.totalorder %s21, 1
      %p211 = por %p209, %p210
      %p212 = scmp.ne.s32.totalorder %s201, %s202
      %p213 = scmp.eq.s32.totalorder %s21, 0
      %p214 = por %p212, %p213
      %p215 = scmp.ne.s32.totalorder %s201, %s202
      %p216 = scmp.eq.s32.totalorder %s22, 1
      %p217 = por %p215, %p216
      %p219 = scmp.ne.s32.totalorder %s202, %s218
      %p220 = scmp.eq.s32.totalorder %s22, 0
      %p221 = por %p219, %p220
      %p222 = scmp.le.s32.totalorder 1, %s16
      %p223 = scmp.lt.s32.totalorder %s16, 3
      %p224 = pnand %p222, %p223
      %p225 = pneg %p224
      // Predicated region
      $region9: #{gnn_layer.1} parent=5 // pred_check
        _
      $region10: #{gnn_layer.1} parent=5 // pred_check_branch
        %227 = sbr.rel (%p224) target = $region12
      $region11: #{gnn_layer.1} parent=5 // pred_region
        %s228 = ssub.s32 %s16, 1
        // Predicated region
        $region13: #{gnn_layer.1} parent=11 // pred_check
          %p229 = pneg %p167
        $region14: #{gnn_layer.1} parent=11 // pred_check_branch
          %231 = sbr.rel (%p229) target = $region16
        $region15: #{gnn_layer.1} parent=11 // pred_region
          _
        $region16: #{gnn_layer.1} parent=11 // pred_fallthru
          _
        // Predicated region
        $region17: #{gnn_layer.1} parent=11 // pred_check
          %p232 = pneg %p188
        $region18: #{gnn_layer.1} parent=11 // pred_check_branch
          %234 = sbr.rel (%p232) target = $region20
        $region19: #{gnn_layer.1} parent=11 // pred_region
          _
        $region20: #{gnn_layer.1} parent=11 // pred_fallthru
          _
      $region12: #{gnn_layer.1} parent=5 // pred_fallthru
        _
      %p235 = scmp.lt.s32.totalorder %s16, 2
      // Predicated region
      $region21: #{gnn_layer.1} parent=5 // pred_check
        %p236 = pneg %p235
      $region22: #{gnn_layer.1} parent=5 // pred_check_branch
        %238 = sbr.rel (%p236) target = $region24
      $region23: #{gnn_layer.1} parent=5 // pred_region
        // Predicated region
        $region25: #{gnn_layer.1} parent=23 // pred_check
          %p239 = pneg %p36
        $region26: #{gnn_layer.1} parent=23 // pred_check_branch
          %241 = sbr.rel (%p239) target = $region28
        $region27: #{gnn_layer.1} parent=23 // pred_region
          %p242 = scmp.lt.s32.totalorder %s16, 1
          %s243 = scalar_select %p242, %s16, 1
          %s244 = smul.addr %s243, 8
          %s245 = scalar_lea.vmem %s0, %s244
        $region28: #{gnn_layer.1} parent=23 // pred_fallthru
          _
        // Predicated region
        $region29: #{gnn_layer.1} parent=23 // pred_check
          %p246 = pneg %p62
        $region30: #{gnn_layer.1} parent=23 // pred_check_branch
          %248 = sbr.rel (%p246) target = $region32
        $region31: #{gnn_layer.1} parent=23 // pred_region
          %p249 = scmp.lt.s32.totalorder %s16, 1
          %s250 = scalar_select %p249, %s16, 1
          %s251 = smul.addr %s250, 4
          %s252 = scalar_lea.vmem %s1, %s251
        $region32: #{gnn_layer.1} parent=23 // pred_fallthru
          _
        // Predicated region
        $region33: #{gnn_layer.1} parent=23 // pred_check
          %p253 = pneg %p88
        $region34: #{gnn_layer.1} parent=23 // pred_check_branch
          %255 = sbr.rel (%p253) target = $region36
        $region35: #{gnn_layer.1} parent=23 // pred_region
          %p256 = scmp.lt.s32.totalorder %s16, 1
          %s257 = scalar_select %p256, %s16, 1
          %s258 = scalar_lea.vmem %s2, %s257
        $region36: #{gnn_layer.1} parent=23 // pred_fallthru
          _
        // Predicated region
        $region37: #{gnn_layer.1} parent=23 // pred_check
          %p259 = pneg %p114
        $region38: #{gnn_layer.1} parent=23 // pred_check_branch
          %261 = sbr.rel (%p259) target = $region40
        $region39: #{gnn_layer.1} parent=23 // pred_region
          %p262 = scmp.lt.s32.totalorder %s16, 1
          %s263 = scalar_select %p262, %s16, 1
          %s264 = scalar_lea.vmem %s3, %s263
        $region40: #{gnn_layer.1} parent=23 // pred_fallthru
          _
        // Predicated region
        $region41: #{gnn_layer.1} parent=23 // pred_check
          %p265 = pneg %p140
        $region42: #{gnn_layer.1} parent=23 // pred_check_branch
          %267 = sbr.rel (%p265) target = $region44
        $region43: #{gnn_layer.1} parent=23 // pred_region
          %p268 = scmp.lt.s32.totalorder %s16, 1
          %s269 = scalar_select %p268, %s16, 1
          %s270 = smul.addr %s269, 8
          %s271 = scalar_lea.vmem %s4, %s270
        $region44: #{gnn_layer.1} parent=23 // pred_fallthru
          _
      $region24: #{gnn_layer.1} parent=5 // pred_fallthru
        _
      %p272 = scmp.le.s32.totalorder 1, %s16
      %p273 = scmp.lt.s32.totalorder %s16, 3
      %p274 = pnand %p272, %p273
      %p275 = pneg %p274
      // Predicated region
      $region45: #{gnn_layer.1} parent=5 // pred_check
        _
      $region46: #{gnn_layer.1} parent=5 // pred_check_branch
        %277 = sbr.rel (%p274) target = $region48
      $region47: #{gnn_layer.1} parent=5 // pred_region
        %s278 = ssub.s32 %s16, 1
        %p279 = scmp.lt.s32.totalorder %s21, 1
        %s280 = scalar_select %p279, %s21, 1
        %s281 = smul.addr %s280, 8
        %s282 = scalar_lea.vmem %s0, %s281
        %p283 = pneg %p42
        %p284 = pneg %p39
        %p285 = scmp.lt.s32.totalorder %s21, 1
        %s286 = scalar_select %p285, %s21, 1
        %s287 = smul.addr %s286, 4
        %s288 = scalar_lea.vmem %s1, %s287
        %p289 = pneg %p68
        %p290 = pneg %p65
        %p291 = scmp.lt.s32.totalorder %s21, 1
        %s292 = scalar_select %p291, %s21, 1
        %s293 = scalar_lea.vmem %s2, %s292
        %p294 = pneg %p94
        %p295 = pneg %p91
        %p296 = scmp.lt.s32.totalorder %s21, 1
        %s297 = scalar_select %p296, %s21, 1
        %s298 = scalar_lea.vmem %s3, %s297
        %p299 = pneg %p120
        %p300 = pneg %p117
        %p301 = scmp.lt.s32.totalorder %s21, 1
        %s302 = scalar_select %p301, %s21, 1
        %s303 = smul.addr %s302, 8
        %s304 = scalar_lea.vmem %s4, %s303
        %p305 = pneg %p146
        %p306 = pneg %p143
        %p307 = pneg %p167
        %p308 = pneg %p164
        %p309 = pneg %p188
        %p310 = pneg %p185
        %p311 = pneg %p214
        %p312 = pneg %p211
        %s313 = sand.u32 %s201, 1
        %s314 = scalar_lea.sflag [#allocation4], %s313
        %s315 = sand.u32 %s201, 1
        %s316 = smul.addr %s315, 8
        %s317 = scalar_lea.vmem [#allocation3], %s316
        %p318 = scmp.lt.s32.totalorder %s21, 1
        %s319 = scalar_select %p318, %s21, 1
        %s320 = smul.addr %s319, 8
        %s321 = scalar_lea.vmem %s0, %s320
        %p322 = scmp.lt.s32.totalorder %s21, 1
        %s323 = scalar_select %p322, %s21, 1
        %s324 = smul.addr %s323, 4
        %s325 = scalar_lea.vmem %s1, %s324
        %p326 = scmp.lt.s32.totalorder %s21, 1
        %s327 = scalar_select %p326, %s21, 1
        %s328 = scalar_lea.vmem %s2, %s327
        %p329 = scmp.lt.s32.totalorder %s21, 1
        %s330 = scalar_select %p329, %s21, 1
        %s331 = scalar_lea.vmem %s3, %s330
        %p332 = scmp.lt.s32.totalorder %s21, 1
        %s333 = scalar_select %p332, %s21, 1
        %s334 = smul.addr %s333, 8
        %s335 = scalar_lea.vmem %s4, %s334
        %v337 = vld [vmem:[%s321] sm:$0xff]
        %v338 = vld [vmem:[%s5] sm:$0xff]
        %v339 = vld [vmem:[%s5 + $0x8] sm:$0xff]
        %v340 = vld [vmem:[%s6] sm:$0x1]
        %v342 = vlaneseq
        %v343 = vshrl.u32 %v342, 7
        %v344 = vsub.s32 0, %v343
        %v345 = vrot.slane %v340, %v344
        %vm347 = vcmask 130048
        %v349 = vsel %vm347, %v337, 0
        %351 = vmatprep.subr.mxu0 0.0
        %352 = vmatpush1.msra.mxu0 %v338
        %353 = vmatprep.subr.mxu0 0.0
        %354 = vmatpush1.msra.mxu0 %v339
        %355 = vmatprep.subr.mxu0 0.0
        %356 = vmatpush1.msra.mxu0 0.0
        %357 = vmatprep.subr.mxu0 0.0
        %358 = vmatpush1.msra.mxu0 0.0
        %359 = vmatprep.subr.mxu0 0.0
        %360 = vmatpush1.msra.mxu0 0.0
        %361 = vmatprep.subr.mxu0 0.0
        %362 = vmatpush1.msra.mxu0 0.0
        %363 = vmatprep.subr.mxu0 0.0
        %364 = vmatpush1.msra.mxu0 0.0
        %365 = vmatprep.subr.mxu0 0.0
        %366 = vmatpush1.msra.mxu0 0.0
        %367 = vmatprep.subr.mxu0 0.0
        %368 = vmatpush1.msra.mxu0 0.0
        %369 = vmatprep.subr.mxu0 0.0
        %370 = vmatpush1.msra.mxu0 0.0
        %371 = vmatprep.subr.mxu0 0.0
        %372 = vmatpush1.msra.mxu0 0.0
        %373 = vmatprep.subr.mxu0 0.0
        %374 = vmatpush1.msra.mxu0 0.0
        %375 = vmatprep.subr.mxu0 0.0
        %376 = vmatpush1.msra.mxu0 0.0
        %377 = vmatprep.subr.mxu0 0.0
        %378 = vmatpush1.msra.mxu0 0.0
        %379 = vmatprep.subr.mxu0 0.0
        %380 = vmatpush1.msra.mxu0 0.0
        %381 = vmatprep.subr.mxu0 0.0
        %382 = vmatpush1.msra.mxu0 0.0
        %383 = vmatprep.subr.mxu0 0.0
        %384 = vmatpush1.msra.mxu0 0.0
        %385 = vmatprep.subr.mxu0 0.0
        %386 = vmatpush1.msra.mxu0 0.0
        %387 = vmatprep.subr.mxu0 0.0
        %388 = vmatpush1.msra.mxu0 0.0
        %389 = vmatprep.subr.mxu0 0.0
        %390 = vmatpush1.msra.mxu0 0.0
        %391 = vmatprep.subr.mxu0 0.0
        %392 = vmatpush1.msra.mxu0 0.0
        %393 = vmatprep.subr.mxu0 0.0
        %394 = vmatpush1.msra.mxu0 0.0
        %395 = vmatprep.subr.mxu0 0.0
        %396 = vmatpush1.msra.mxu0 0.0
        %397 = vmatprep.subr.mxu0 0.0
        %398 = vmatpush1.msra.mxu0 0.0
        %399 = vmatprep.subr.mxu0 0.0
        %400 = vmatpush1.msra.mxu0 0.0
        %401 = vmatprep.subr.mxu0 0.0
        %402 = vmatpush1.msra.mxu0 0.0
        %403 = vmatprep.subr.mxu0 0.0
        %404 = vmatpush1.msra.mxu0 0.0
        %405 = vmatprep.subr.mxu0 0.0
        %406 = vmatpush1.msra.mxu0 0.0
        %407 = vmatprep.subr.mxu0 0.0
        %408 = vmatpush1.msra.mxu0 0.0
        %409 = vmatprep.subr.mxu0 0.0
        %410 = vmatpush1.msra.mxu0 0.0
        %411 = vmatprep.subr.mxu0 0.0
        %412 = vmatpush1.msra.mxu0 0.0
        %413 = vmatprep.subr.mxu0 0.0
        %414 = vmatpush1.msra.mxu0 0.0
        %415 = vmatprep.mubr.f32.mxu0 0.0
        %416 = vmatmul.mubr.f32.gmra.mrb[0].mxu0 %v349
        %v417 = vpop.f32.mrb[0].mxu0
        %v418 = vadd.f32 %v345, %v417
        %v419 = vpop.f32.mrb[0].mxu0
        %420 = vdwg.mxu0
        %vm421 = vcmask 277504
        %422 = vst.msk [vmem:[#allocation2] sm:$0xff] %vm421, %v418
        %v423 = vld [vmem:[#allocation2] sm:$0xff]
        %v424 = vld [vmem:[%s328] sm:$0x1]
        %v425 = vld [vmem:[%s331] sm:$0x1]
        %v426 = vld [vmem:[%s335] sm:$0xff]
        %428 = vset.pattern.permute.xlu0 33
        %429 = vperm.xlu0 %428, %v423
        %v430 = vpop.permute.xlu0 %429
        %v433 = vlaneseq
        %v434 = vshrl.u32 %v433, 7
        %v435 = vsub.s32 0, %v434
        %v436 = vrot.slane %v424, %v435
        %v438 = vadd.f32 %v430, %v436
        %v439 = vtanh.pop %v438
        %v440 = vadd.f32 %v439, 1.0
        %v441 = vld [vmem:[%s325] sm:$0xf]
        %v442 = vunpack.c.l.bf16 %v441
        %v443 = vmul.f32 %v440, %v442
        %v445 = vlaneseq
        %v446 = vshrl.u32 %v445, 7
        %v447 = vsub.s32 0, %v446
        %v448 = vrot.slane %v425, %v447
        %v450 = vmul.f32 %v443, %v448
        %v451 = vpack.c.bf16 %v450, %v450
        %v452 = vpack.c.bf16 %v423, %v423
        %vm453 = vcmask 64512
        %v455 = vsel %vm453, %v451, 0
        %vm457 = vcmask 1043456
        %v459 = vsel %vm457, %v452, 0
        %461 = vmatprep.subr.bf16.mxu0 0
        %462 = vmatpush1.bf16.msra.mxu0 %v459
        %463 = vmatprep.subr.bf16.mxu0 0
        %464 = vmatpush1.bf16.msra.mxu0 0
        %465 = vmatprep.subr.bf16.mxu0 0
        %466 = vmatpush1.bf16.msra.mxu0 0
        %467 = vmatprep.subr.bf16.mxu0 0
        %468 = vmatpush1.bf16.msra.mxu0 0
        %469 = vmatprep.subr.bf16.mxu0 0
        %470 = vmatpush1.bf16.msra.mxu0 0
        %471 = vmatprep.subr.bf16.mxu0 0
        %472 = vmatpush1.bf16.msra.mxu0 0
        %473 = vmatprep.subr.bf16.mxu0 0
        %474 = vmatpush1.bf16.msra.mxu0 0
        %475 = vmatprep.subr.bf16.mxu0 0
        %476 = vmatpush1.bf16.msra.mxu0 0
        %477 = vmatprep.subr.bf16.mxu0 0
        %478 = vmatpush1.bf16.msra.mxu0 0
        %479 = vmatprep.subr.bf16.mxu0 0
        %480 = vmatpush1.bf16.msra.mxu0 0
        %481 = vmatprep.subr.bf16.mxu0 0
        %482 = vmatpush1.bf16.msra.mxu0 0
        %483 = vmatprep.subr.bf16.mxu0 0
        %484 = vmatpush1.bf16.msra.mxu0 0
        %485 = vmatprep.subr.bf16.mxu0 0
        %486 = vmatpush1.bf16.msra.mxu0 0
        %487 = vmatprep.subr.bf16.mxu0 0
        %488 = vmatpush1.bf16.msra.mxu0 0
        %489 = vmatprep.subr.bf16.mxu0 0
        %490 = vmatpush1.bf16.msra.mxu0 0
        %491 = vmatprep.subr.bf16.mxu0 0
        %492 = vmatpush1.bf16.msra.mxu0 0
        %493 = vmatprep.mubr.bf16.mxu0 0
        %494 = vmatmul.mubr.bf16.gmra.mrb[0].mxu0 %v455
        %v495 = vpop.f32.mrb[0].mxu0
        %v496 = vadd.f32 0.0, %v495
        %v497 = vpop.f32.mrb[0].mxu0
        %v498 = vpop.f32.mrb[0].mxu0
        %v499 = vpop.f32.mrb[0].mxu0
        %500 = vdwg.mxu0
        %v501 = vadd.f32 %v496, 1e-08
        %v502 = vrcp.pop %v501
        %504 = vrot.lane.b32.xlu0 %v426, 32
        %v505 = vpop.permute.xlu0 %504
        %v507 = vmul.f32 %v502, %v505
        %509 = vset.pattern.permute.xlu0 32
        %510 = vperm.xlu0 %509, %v507
        %v511 = vpop.permute.xlu0 %510
        %v513 = vmul.f32 %v496, %v511
        %vm514 = vcmask 261120
        %515 = vst.msk [vmem:[%s317] sm:$0xff] %vm514, %v513
        %s516 = sand.u32 %s201, 1
        %s517 = scalar_lea.sflag [#allocation4], %s516
        %s518 = sand.u32 %s201, 1
        %s519 = smul.addr %s518, 8
        %s520 = scalar_lea.vmem [#allocation3], %s519
        // Predicated region
        $region49: #{gnn_layer.1} parent=47 // pred_check
          %p521 = pneg %p211
        $region50: #{gnn_layer.1} parent=47 // pred_check_branch
          %523 = sbr.rel (%p521) target = $region52
        $region51: #{gnn_layer.1} parent=47 // pred_region
          %s525 = ssub.s32 128, 128
          %526 = vsyncadd %s517, %s525
          %s527 = smul.addr %s21, 128
          %s528 = scalar_lea.hbm %s7, %s527
          %s530 = sshll.u32 %s520, 4
          %s531 = int_to_ptr.vmem [resolvable:$true] %s530
          %533 = dma.vmem_to_hbm [thread:$0]  %s531, 128, %s528, %s517
        $region52: #{gnn_layer.1} parent=47 // pred_fallthru
          _
      $region48: #{gnn_layer.1} parent=5 // pred_fallthru
        _
      %p534 = scmp.le.s32.totalorder 2, %s16
      // Predicated region
      $region53: #{gnn_layer.1} parent=5 // pred_check
        %p535 = pneg %p534
      $region54: #{gnn_layer.1} parent=5 // pred_check_branch
        %537 = sbr.rel (%p535) target = $region56
      $region55: #{gnn_layer.1} parent=5 // pred_region
        %s538 = ssub.s32 %s16, 2
        // Predicated region
        $region57: #{gnn_layer.1} parent=55 // pred_check
          %p539 = pneg %p217
        $region58: #{gnn_layer.1} parent=55 // pred_check_branch
          %541 = sbr.rel (%p539) target = $region60
        $region59: #{gnn_layer.1} parent=55 // pred_region
          %s542 = sand.u32 %s202, 1
          %s543 = scalar_lea.sflag [#allocation4], %s542
          %s544 = sand.u32 %s202, 1
          %s545 = smul.addr %s544, 8
          %s546 = scalar_lea.vmem [#allocation3], %s545
          %547 = dma.done %s543, 128
        $region60: #{gnn_layer.1} parent=55 // pred_fallthru
          _
      $region56: #{gnn_layer.1} parent=5 // pred_fallthru
        _
    $region6: #{gnn_layer.1} parent=1 // loop_footer
      %s20 = sadd.s32 1, %s16
    $region7: #{gnn_layer.1} parent=1 // loop_footer_branch
      %15 = sbr.rel target = $region3
    $region8: #{gnn_layer.1} parent=1 // loop_exit
      _
    %548 = vsyncpa [#allocation4], 1
    %s549 = scalar_lea.sflag [#allocation4], 1
    %550 = vsyncpa %s549, 1

</llo_original>
